<compile_context>
chip_gen: v7x
topology: tpu7x:2x2x1
jax: 0.10.0
libtpu: 0.0.40
codegen_flags: <defaults>
</compile_context>

<pallas_src>
import functools
import math

import jax
import jax.numpy as jnp
from jax.experimental import pallas as pl
from jax.experimental.pallas import tpu as pltpu


def _round_up(v, m):
    return ((v + m - 1) // m) * m


def _vmem_limit_bytes():
    # Generation-aware cap: ~3/4 of physical VMEM (64 MiB on v7x, 128 MiB v5e/v6e),
    # never above 100 MiB.
    try:
        phys = int(pltpu.get_tpu_info().vmem_capacity_bytes)
    except Exception:
        phys = 64 * 1024 * 1024
    return min(phys * 3 // 4, 100 * 1024 * 1024)


# --------------------------- kernels ---------------------------------------

def _linear_scale_kernel(x_ref, wt_ref, dinv_ref, hs_ref):
    # h_s = (x @ W^T) * deg^-1/2 (row scaling); f32 matmul, bf16 store to halve
    # the HBM write and all downstream reads.
    h = jnp.dot(x_ref[...], wt_ref[...], preferred_element_type=jnp.float32)
    hs_ref[...] = (h * dinv_ref[...]).astype(hs_ref.dtype)


def _propagate_kernel(at_ref, hs_ref, dinv_c_ref, b_ref, o_ref, *,
                      tile_r, hs_resident):
    r = pl.program_id(1)

    @pl.when(r == 0)
    def _():
        o_ref[...] = jnp.zeros_like(o_ref)

    # int8 -> bf16 upcast on the VPU (free: this kernel is HBM-DMA bound).
    at = at_ref[...].astype(jnp.bfloat16)
    if hs_resident:
        hs = hs_ref[pl.ds(pl.multiple_of(r * tile_r, tile_r), tile_r), :]
    else:
        hs = hs_ref[...]

    # out[c, :] += sum_r At[c, r] * h_s[r, :]
    # (A is stored pre-transposed, so this is a plain MXU-native contraction.)
    o_ref[...] += jnp.dot(at, hs, preferred_element_type=jnp.float32)

    @pl.when(r == pl.num_programs(1) - 1)
    def _():
        o_ref[...] = o_ref[...] * dinv_c_ref[...] + b_ref[...]


# --------------------------- wrapper ----------------------------------------

def gcn_encoder_scatter(x, weight, bias, adj_counts, *, tile_c=512, tile_r=512):
    """x: (N, F), weight: (H, F) torch layout, bias: (H,), adj_counts: (N, N)
    dense edge-count matrix with self-loops already added."""
    N, F = x.shape
    H = weight.shape[0]

    Hp = _round_up(H, 128)
    Np = _round_up(N, 128)

    # Clamp tiles to the (padded) problem size; keep >= 2 output (c) tiles when
    # possible so the "parallel" c axis load-balances v7x's two TensorCores.
    tile_c = max(128, min(tile_c, Np))
    if Np >= 256 and Np // tile_c < 2:
        tile_c = max(128, ((Np // 2) // 128) * 128)
    tile_r = max(128, min(tile_r, Np))
    Np = _round_up(Np, math.lcm(tile_c, tile_r))

    # F left unpadded (full-extent K blocks are legal); only N and H are padded.
    x_p = jnp.zeros((Np, F), jnp.float32).at[:N, :].set(x.astype(jnp.float32))
    wt_p = jnp.zeros((F, Hp), jnp.float32).at[:, :H].set(weight.T.astype(jnp.float32))
    b_p = jnp.zeros((1, Hp), jnp.float32).at[0, :H].set(bias.astype(jnp.float32))

    # Adjacency: transposed once here (one-time XLA op, never inside the kernel)
    # and narrowed to int8 (exact small counts) to cut the dominant O(N^2) stream.
    # TODO(synk): assumes per-pair edge multiplicities <= 127.
    at_p = jnp.zeros((Np, Np), jnp.int8).at[:N, :N].set(
        jnp.transpose(adj_counts).astype(jnp.int8))

    # Degree / normalization hoisted out of the kernels; padded nodes -> dinv = 0
    # so they contribute exactly zero (no NaN/Inf).
    deg = jnp.sum(adj_counts.astype(jnp.float32), axis=0)
    dinv_n = jnp.where(deg > 0.0, jax.lax.rsqrt(deg), 0.0)
    dinv = jnp.zeros((Np, 1), jnp.float32).at[:N, 0].set(dinv_n)

    vmem_cap = _vmem_limit_bytes()
    n_r = Np // tile_r
    n_c = Np // tile_c

    # ---- kernel 1: h_s = (x @ W^T) * dinv_row  (bf16 output) ----
    hs = pl.pallas_call(
        _linear_scale_kernel,
        out_shape=jax.ShapeDtypeStruct((Np, Hp), jnp.bfloat16),
        grid=(n_r,),
        in_specs=[
            pl.BlockSpec((tile_r, F), lambda i: (i, 0)),
            pl.BlockSpec((F, Hp), lambda i: (0, 0)),
            pl.BlockSpec((tile_r, 1), lambda i: (i, 0)),
        ],
        out_specs=pl.BlockSpec((tile_r, Hp), lambda i: (i, 0)),
        compiler_params=pltpu.CompilerParams(
            dimension_semantics=("parallel",),
            vmem_limit_bytes=vmem_cap),
    )(x_p, wt_p, dinv)

    # h_s stays fully VMEM-resident in kernel 2 when small enough (fetched from
    # HBM exactly once); otherwise streamed as (tile_r, Hp) blocks per r step.
    hs_bytes = Np * Hp * 2
    hs_resident = hs_bytes <= min(vmem_cap // 4, 8 * 1024 * 1024)
    if hs_resident:
        hs_spec = pl.BlockSpec((Np, Hp), lambda c, r: (0, 0))
    else:
        hs_spec = pl.BlockSpec((tile_r, Hp), lambda c, r: (r, 0))

    kernel2 = functools.partial(_propagate_kernel,
                                tile_r=tile_r, hs_resident=hs_resident)

    # ---- kernel 2: out[c] = dinv[c] * sum_r A[r, c] * h_s[r] + bias ----
    out_p = pl.pallas_call(
        kernel2,
        out_shape=jax.ShapeDtypeStruct((Np, Hp), jnp.float32),
        grid=(n_c, n_r),                                            # (c, r): reduction last
        in_specs=[
            pl.BlockSpec((tile_c, tile_r), lambda c, r: (c, r)),    # At tile (int8)
            hs_spec,                                                # h_s (bf16)
            pl.BlockSpec((tile_c, 1), lambda c, r: (c, 0)),         # dinv (cols)
            pl.BlockSpec((1, Hp), lambda c, r: (0, 0)),             # bias
        ],
        out_specs=pl.BlockSpec((tile_c, Hp), lambda c, r: (c, 0)),  # resident accumulator
        compiler_params=pltpu.CompilerParams(
            dimension_semantics=("parallel", "arbitrary"),
            vmem_limit_bytes=vmem_cap),
    )(at_p, hs, dinv, b_p)

    return out_p[:N, :H]


# --------------------------- glue + reference --------------------------------

def build_dense_adj(edge_index, num_nodes):
    """Dense edge-count matrix + add_remaining_self_loops semantics."""
    row, col = edge_index[0], edge_index[1]
    A = jnp.zeros((num_nodes, num_nodes), jnp.float32).at[row, col].add(1.0)
    diag = jnp.diagonal(A)
    # add a self-loop only to nodes that don't already have one
    A = A + jnp.diag(jnp.where(diag == 0.0, 1.0, 0.0))
    return A


def reference_forward(x, weight, bias, adj_counts):
    """Pure-JAX reference for correctness check (self-loops guarantee deg >= 1)."""
    h = x @ weight.T
    deg = jnp.sum(adj_counts, axis=0)
    dinv = deg ** -0.5
    scaled = adj_counts * dinv[:, None] * dinv[None, :]
    return scaled.T @ h + bias[None, :]


if __name__ == "__main__":
    # small shapes consistent with the module: N nodes, num_features, hidden
    N, F, H = 16, 8, 32

    key = jax.random.PRNGKey(0)
    kx, kw, kb, ke = jax.random.split(key, 4)

    x = jax.random.normal(kx, (N, F), dtype=jnp.float32)
    # synthetic parameters (shapes from __init__: Linear(F, H, bias=False), bias (H,))
    weight = jax.random.normal(kw, (H, F), dtype=jnp.float32) * (1.0 / jnp.sqrt(F))
    bias = jax.random.normal(kb, (H,), dtype=jnp.float32) * 0.1

    # random undirected edge list (both directions), no self-loops
    src = jax.random.randint(ke, (24,), 0, N)
    dst = (src + 1 + jax.random.randint(jax.random.fold_in(ke, 1), (24,), 0, N - 1)) % N
    edge_index = jnp.stack([jnp.concatenate([src, dst]),
                            jnp.concatenate([dst, src])], axis=0)

    A = build_dense_adj(edge_index, N)

    out = gcn_encoder_scatter(x, weight, bias, A)
    out = jax.block_until_ready(out)

    ref = reference_forward(x, weight, bias, A)
    assert out.shape == (N, H)
    # Tolerance loosened slightly: h_s travels through HBM as bf16 (A narrowing
    # to int8 is exact); accumulation stays f32.
    assert jnp.allclose(out, ref, atol=3e-2, rtol=3e-2), "mismatch vs reference"

    print("KERNEL_OK")
</pallas_src>

<mosaic_0001>
module attributes {stable_mosaic.version = 11 : i64} {
  func.func @_linear_scale_kernel(%arg0: i32, %arg1: memref<128x8xf32, #tpu.memory_space<vmem>>, %arg2: memref<8x128xf32, #tpu.memory_space<vmem>>, %arg3: memref<128x1xf32, #tpu.memory_space<vmem>>, %arg4: memref<128x128xbf16, #tpu.memory_space<vmem>>) attributes {dimension_semantics = [#tpu.dimension_semantics<parallel>], iteration_bounds = array<i64: 1>, scalar_prefetch = 0 : i64, scratch_operands = 0 : i64, tpu.core_type = #tpu.core_type<tc>, window_params = [{transform_indices = @transform_0, window_bounds = array<i64: 128, 8>}, {pipeline_mode = #tpu.pipeline_mode<synchronous>, transform_indices = @transform_1, window_bounds = array<i64: 8, 128>}, {transform_indices = @transform_2, window_bounds = array<i64: 128, 1>}, {transform_indices = @transform_3, window_bounds = array<i64: 128, 128>}]} {
    %c0 = arith.constant 0 : index
    %c0_0 = arith.constant 0 : index
    %0 = vector.load %arg1[%c0, %c0_0] : memref<128x8xf32, #tpu.memory_space<vmem>>, vector<128x8xf32>
    %c0_1 = arith.constant 0 : index
    %c0_2 = arith.constant 0 : index
    %1 = vector.load %arg2[%c0_1, %c0_2] : memref<8x128xf32, #tpu.memory_space<vmem>>, vector<8x128xf32>
    %cst = arith.constant dense<0.000000e+00> : vector<128x128xf32>
    %2 = tpu.matmul %0, %1, %cst {dimension_numbers = #tpu.dot_dimension_numbers<[1], [0], [0], [1], [0, 0, 1, 1], [], []>} : vector<128x8xf32>, vector<8x128xf32>, vector<128x128xf32> -> vector<128x128xf32>
    %c0_3 = arith.constant 0 : index
    %c0_4 = arith.constant 0 : index
    %3 = vector.load %arg3[%c0_3, %c0_4] : memref<128x1xf32, #tpu.memory_space<vmem>>, vector<128x1xf32>
    %4 = vector.broadcast %3 : vector<128x1xf32> to vector<128x128xf32>
    %5 = arith.mulf %2, %4 : vector<128x128xf32>
    %6 = arith.truncf %5 : vector<128x128xf32> to vector<128x128xbf16>
    %c0_5 = arith.constant 0 : index
    %c0_6 = arith.constant 0 : index
    %7 = vector.load %arg4[%c0_5, %c0_6] : memref<128x128xbf16, #tpu.memory_space<vmem>>, vector<128x128xbf16>
    tpu.vector_store %arg4[%c0_5, %c0_6], %6 {strides = array<i32>} : memref<128x128xbf16, #tpu.memory_space<vmem>>, vector<128x128xbf16>,
    return
  }
  func.func @transform_0(%arg0: i32) -> (i32, i32) {
    %c0_i32 = arith.constant 0 : i32
    %c0_i32_0 = arith.constant 0 : i32
    return %arg0, %c0_i32 : i32, i32
  }
  func.func @transform_1(%arg0: i32) -> (i32, i32) {
    %c0_i32 = arith.constant 0 : i32
    %c0_i32_0 = arith.constant 0 : i32
    %c0_i32_1 = arith.constant 0 : i32
    return %c0_i32, %c0_i32_0 : i32, i32
  }
  func.func @transform_2(%arg0: i32) -> (i32, i32) {
    %c0_i32 = arith.constant 0 : i32
    %c0_i32_0 = arith.constant 0 : i32
    return %arg0, %c0_i32 : i32, i32
  }
  func.func @transform_3(%arg0: i32) -> (i32, i32) {
    %c0_i32 = arith.constant 0 : i32
    %c0_i32_0 = arith.constant 0 : i32
    return %arg0, %c0_i32 : i32, i32
  }
}

</mosaic_0001>

<llo_original>
// kernel: tpu_custom_call.1
$region0: #{tpu_custom_call.1}
  #allocation0 [shape = 'u32[]', space=smem, size = 0x4, offset = 0x4, fixed_abs, tag = 'smem constant byte address 0x4 - core index']
  #allocation1 [shape = 'u32[144,128]{1,0:T(1,128)}', space=vmem, size = 0x12000, scoped, tag = 'internal scratch']
  %s0 = inlined_call_operand.vmem [shape: f32[128,8], index: 0, kind: input, shape index: {}]
  %s1 = inlined_call_operand.vmem [shape: f32[8,128], index: 1, kind: input, shape index: {}]
  %s2 = inlined_call_operand.vmem [shape: f32[128,1], index: 2, kind: input, shape index: {}]
  %s3 = inlined_call_operand.hbm [shape: bf16[128,128], index: 3, kind: output, shape index: {}]
  %s4 = sld [smem:[#allocation0]]
  $region22: #{tpu_custom_call.1} parent=0
    _
  %s6 = ssub.s32 1, %s4
  %s7 = scalar_select 0, %s6, %s4
  $region1: #{tpu_custom_call.1} parent=0
    #allocation2 [shape = 'u8[32768]{0}', space=vmem, size = 0x8000, scoped, tag = 'output window, operand 0, single buffered']
    #allocation3 [shape = 's32[1]{0}', space=sflag, size = 0x4, scoped, tag = 'scoped memory for tpu_custom_call.1']
    %8 = vsyncpa [#allocation3], 0
    // Predicated region
    $region2: #{tpu_custom_call.1} parent=1 // pred_check
      _
    $region3: #{tpu_custom_call.1} parent=1 // pred_check_branch
      %10 = sbr.rel (0) target = $region5
    $region4: #{tpu_custom_call.1} parent=1 // pred_region
      _
    $region5: #{tpu_custom_call.1} parent=1 // pred_fallthru
      _
    // Predicated region
    $region6: #{tpu_custom_call.1} parent=1 // pred_check
      _
    $region7: #{tpu_custom_call.1} parent=1 // pred_check_branch
      %12 = sbr.rel (0) target = $region9
    $region8: #{tpu_custom_call.1} parent=1 // pred_region
      _
    $region9: #{tpu_custom_call.1} parent=1 // pred_fallthru
      _
    // Predicated region
    $region10: #{tpu_custom_call.1} parent=1 // pred_check
      _
    $region11: #{tpu_custom_call.1} parent=1 // pred_check_branch
      %14 = sbr.rel (0) target = $region13
    $region12: #{tpu_custom_call.1} parent=1 // pred_region
      _
    $region13: #{tpu_custom_call.1} parent=1 // pred_fallthru
      _
    %v15 = vld [vmem:[%s0] sm:$0xff]
    %v16 = vld [vmem:[%s0 + $0x8] sm:$0xff]
    %v17 = vld [vmem:[%s0 + $0x10] sm:$0xff]
    %v18 = vld [vmem:[%s0 + $0x18] sm:$0xff]
    %v19 = vld [vmem:[%s0 + $0x20] sm:$0xff]
    %v20 = vld [vmem:[%s0 + $0x28] sm:$0xff]
    %v21 = vld [vmem:[%s0 + $0x30] sm:$0xff]
    %v22 = vld [vmem:[%s0 + $0x38] sm:$0xff]
    %v23 = vld [vmem:[%s0 + $0x40] sm:$0xff]
    %v24 = vld [vmem:[%s0 + $0x48] sm:$0xff]
    %v25 = vld [vmem:[%s0 + $0x50] sm:$0xff]
    %v26 = vld [vmem:[%s0 + $0x58] sm:$0xff]
    %v27 = vld [vmem:[%s0 + $0x60] sm:$0xff]
    %v28 = vld [vmem:[%s0 + $0x68] sm:$0xff]
    %v29 = vld [vmem:[%s0 + $0x70] sm:$0xff]
    %v30 = vld [vmem:[%s0 + $0x78] sm:$0xff]
    %v31 = vld [vmem:[%s1] sm:$0xff]
    %vm32 = vcmask 64512
    %v34 = vsel %vm32, %v15, 0
    %v37 = vsel %vm32, %v16, 0
    %v40 = vsel %vm32, %v17, 0
    %v43 = vsel %vm32, %v18, 0
    %v46 = vsel %vm32, %v19, 0
    %v49 = vsel %vm32, %v20, 0
    %v52 = vsel %vm32, %v21, 0
    %v55 = vsel %vm32, %v22, 0
    %v58 = vsel %vm32, %v23, 0
    %v61 = vsel %vm32, %v24, 0
    %v64 = vsel %vm32, %v25, 0
    %v67 = vsel %vm32, %v26, 0
    %v70 = vsel %vm32, %v27, 0
    %v73 = vsel %vm32, %v28, 0
    %v76 = vsel %vm32, %v29, 0
    %v79 = vsel %vm32, %v30, 0
    %81 = vmatprep.subr.mxu0 0.0
    %82 = vmatpush1.msra.mxu0 %v31
    %83 = vmatprep.subr.mxu0 0.0
    %84 = vmatpush1.msra.mxu0 0.0
    %85 = vmatprep.subr.mxu0 0.0
    %86 = vmatpush1.msra.mxu0 0.0
    %87 = vmatprep.subr.mxu0 0.0
    %88 = vmatpush1.msra.mxu0 0.0
    %89 = vmatprep.subr.mxu0 0.0
    %90 = vmatpush1.msra.mxu0 0.0
    %91 = vmatprep.subr.mxu0 0.0
    %92 = vmatpush1.msra.mxu0 0.0
    %93 = vmatprep.subr.mxu0 0.0
    %94 = vmatpush1.msra.mxu0 0.0
    %95 = vmatprep.subr.mxu0 0.0
    %96 = vmatpush1.msra.mxu0 0.0
    %97 = vmatprep.subr.mxu0 0.0
    %98 = vmatpush1.msra.mxu0 0.0
    %99 = vmatprep.subr.mxu0 0.0
    %100 = vmatpush1.msra.mxu0 0.0
    %101 = vmatprep.subr.mxu0 0.0
    %102 = vmatpush1.msra.mxu0 0.0
    %103 = vmatprep.subr.mxu0 0.0
    %104 = vmatpush1.msra.mxu0 0.0
    %105 = vmatprep.subr.mxu0 0.0
    %106 = vmatpush1.msra.mxu0 0.0
    %107 = vmatprep.subr.mxu0 0.0
    %108 = vmatpush1.msra.mxu0 0.0
    %109 = vmatprep.subr.mxu0 0.0
    %110 = vmatpush1.msra.mxu0 0.0
    %111 = vmatprep.subr.mxu0 0.0
    %112 = vmatpush1.msra.mxu0 0.0
    %113 = vmatprep.subr.mxu0 0.0
    %114 = vmatpush1.msra.mxu0 0.0
    %115 = vmatprep.subr.mxu0 0.0
    %116 = vmatpush1.msra.mxu0 0.0
    %117 = vmatprep.subr.mxu0 0.0
    %118 = vmatpush1.msra.mxu0 0.0
    %119 = vmatprep.subr.mxu0 0.0
    %120 = vmatpush1.msra.mxu0 0.0
    %121 = vmatprep.subr.mxu0 0.0
    %122 = vmatpush1.msra.mxu0 0.0
    %123 = vmatprep.subr.mxu0 0.0
    %124 = vmatpush1.msra.mxu0 0.0
    %125 = vmatprep.subr.mxu0 0.0
    %126 = vmatpush1.msra.mxu0 0.0
    %127 = vmatprep.subr.mxu0 0.0
    %128 = vmatpush1.msra.mxu0 0.0
    %129 = vmatprep.subr.mxu0 0.0
    %130 = vmatpush1.msra.mxu0 0.0
    %131 = vmatprep.subr.mxu0 0.0
    %132 = vmatpush1.msra.mxu0 0.0
    %133 = vmatprep.subr.mxu0 0.0
    %134 = vmatpush1.msra.mxu0 0.0
    %135 = vmatprep.subr.mxu0 0.0
    %136 = vmatpush1.msra.mxu0 0.0
    %137 = vmatprep.subr.mxu0 0.0
    %138 = vmatpush1.msra.mxu0 0.0
    %139 = vmatprep.subr.mxu0 0.0
    %140 = vmatpush1.msra.mxu0 0.0
    %141 = vmatprep.subr.mxu0 0.0
    %142 = vmatpush1.msra.mxu0 0.0
    %143 = vmatprep.subr.mxu0 0.0
    %144 = vmatpush1.msra.mxu0 0.0
    %145 = vmatprep.mubr.f32.mxu0 0.0
    %146 = vmatmul.mubr.f32.gmra.mrb[0].mxu0 %v34
    %v147 = vpop.f32.mrb[0].mxu0
    %v148 = vadd.f32 0.0, %v147
    %v149 = vpop.f32.mrb[0].mxu0
    %150 = vmatprep.mubr.f32.mxu0 0.0
    %151 = vmatmul.mubr.f32.gmra.mrb[0].mxu0 %v37
    %v152 = vpop.f32.mrb[0].mxu0
    %v153 = vadd.f32 0.0, %v152
    %v154 = vpop.f32.mrb[0].mxu0
    %155 = vmatprep.mubr.f32.mxu0 0.0
    %156 = vmatmul.mubr.f32.gmra.mrb[0].mxu0 %v40
    %v157 = vpop.f32.mrb[0].mxu0
    %v158 = vadd.f32 0.0, %v157
    %v159 = vpop.f32.mrb[0].mxu0
    %160 = vmatprep.mubr.f32.mxu0 0.0
    %161 = vmatmul.mubr.f32.gmra.mrb[0].mxu0 %v43
    %v162 = vpop.f32.mrb[0].mxu0
    %v163 = vadd.f32 0.0, %v162
    %v164 = vpop.f32.mrb[0].mxu0
    %165 = vmatprep.mubr.f32.mxu0 0.0
    %166 = vmatmul.mubr.f32.gmra.mrb[0].mxu0 %v46
    %v167 = vpop.f32.mrb[0].mxu0
    %v168 = vadd.f32 0.0, %v167
    %v169 = vpop.f32.mrb[0].mxu0
    %170 = vmatprep.mubr.f32.mxu0 0.0
    %171 = vmatmul.mubr.f32.gmra.mrb[0].mxu0 %v49
    %v172 = vpop.f32.mrb[0].mxu0
    %v173 = vadd.f32 0.0, %v172
    %v174 = vpop.f32.mrb[0].mxu0
    %175 = vmatprep.mubr.f32.mxu0 0.0
    %176 = vmatmul.mubr.f32.gmra.mrb[0].mxu0 %v52
    %v177 = vpop.f32.mrb[0].mxu0
    %v178 = vadd.f32 0.0, %v177
    %v179 = vpop.f32.mrb[0].mxu0
    %180 = vmatprep.mubr.f32.mxu0 0.0
    %181 = vmatmul.mubr.f32.gmra.mrb[0].mxu0 %v55
    %v182 = vpop.f32.mrb[0].mxu0
    %v183 = vadd.f32 0.0, %v182
    %v184 = vpop.f32.mrb[0].mxu0
    %185 = vmatprep.mubr.f32.mxu0 0.0
    %186 = vmatmul.mubr.f32.gmra.mrb[0].mxu0 %v58
    %v187 = vpop.f32.mrb[0].mxu0
    %v188 = vadd.f32 0.0, %v187
    %v189 = vpop.f32.mrb[0].mxu0
    %190 = vmatprep.mubr.f32.mxu0 0.0
    %191 = vmatmul.mubr.f32.gmra.mrb[0].mxu0 %v61
    %v192 = vpop.f32.mrb[0].mxu0
    %v193 = vadd.f32 0.0, %v192
    %v194 = vpop.f32.mrb[0].mxu0
    %195 = vmatprep.mubr.f32.mxu0 0.0
    %196 = vmatmul.mubr.f32.gmra.mrb[0].mxu0 %v64
    %v197 = vpop.f32.mrb[0].mxu0
    %v198 = vadd.f32 0.0, %v197
    %v199 = vpop.f32.mrb[0].mxu0
    %200 = vmatprep.mubr.f32.mxu0 0.0
    %201 = vmatmul.mubr.f32.gmra.mrb[0].mxu0 %v67
    %v202 = vpop.f32.mrb[0].mxu0
    %v203 = vadd.f32 0.0, %v202
    %v204 = vpop.f32.mrb[0].mxu0
    %205 = vmatprep.mubr.f32.mxu0 0.0
    %206 = vmatmul.mubr.f32.gmra.mrb[0].mxu0 %v70
    %v207 = vpop.f32.mrb[0].mxu0
    %v208 = vadd.f32 0.0, %v207
    %v209 = vpop.f32.mrb[0].mxu0
    %210 = vmatprep.mubr.f32.mxu0 0.0
    %211 = vmatmul.mubr.f32.gmra.mrb[0].mxu0 %v73
    %v212 = vpop.f32.mrb[0].mxu0
    %v213 = vadd.f32 0.0, %v212
    %v214 = vpop.f32.mrb[0].mxu0
    %215 = vmatprep.mubr.f32.mxu0 0.0
    %216 = vmatmul.mubr.f32.gmra.mrb[0].mxu0 %v76
    %v217 = vpop.f32.mrb[0].mxu0
    %v218 = vadd.f32 0.0, %v217
    %v219 = vpop.f32.mrb[0].mxu0
    %220 = vmatprep.mubr.f32.mxu0 0.0
    %221 = vmatmul.mubr.f32.gmra.mrb[0].mxu0 %v79
    %v222 = vpop.f32.mrb[0].mxu0
    %v223 = vadd.f32 0.0, %v222
    %v224 = vpop.f32.mrb[0].mxu0
    %225 = vdwg.mxu0
    %v226 = vld [vmem:[%s2] sm:$0xff]
    %v227 = vld [vmem:[%s2 + $0x8] sm:$0xff]
    %v228 = vld [vmem:[%s2 + $0x10] sm:$0xff]
    %v229 = vld [vmem:[%s2 + $0x18] sm:$0xff]
    %v230 = vld [vmem:[%s2 + $0x20] sm:$0xff]
    %v231 = vld [vmem:[%s2 + $0x28] sm:$0xff]
    %v232 = vld [vmem:[%s2 + $0x30] sm:$0xff]
    %v233 = vld [vmem:[%s2 + $0x38] sm:$0xff]
    %v234 = vld [vmem:[%s2 + $0x40] sm:$0xff]
    %v235 = vld [vmem:[%s2 + $0x48] sm:$0xff]
    %v236 = vld [vmem:[%s2 + $0x50] sm:$0xff]
    %v237 = vld [vmem:[%s2 + $0x58] sm:$0xff]
    %v238 = vld [vmem:[%s2 + $0x60] sm:$0xff]
    %v239 = vld [vmem:[%s2 + $0x68] sm:$0xff]
    %v240 = vld [vmem:[%s2 + $0x70] sm:$0xff]
    %v241 = vld [vmem:[%s2 + $0x78] sm:$0xff]
    %243 = vset.pattern.permute.xlu0 0
    %244 = vperm.xlu0 %243, %v226
    %v245 = vpop.permute.xlu0 %244
    %248 = vset.pattern.permute.xlu0 0
    %249 = vperm.xlu0 %248, %v227
    %v250 = vpop.permute.xlu0 %249
    %253 = vset.pattern.permute.xlu0 0
    %254 = vperm.xlu0 %253, %v228
    %v255 = vpop.permute.xlu0 %254
    %258 = vset.pattern.permute.xlu0 0
    %259 = vperm.xlu0 %258, %v229
    %v260 = vpop.permute.xlu0 %259
    %263 = vset.pattern.permute.xlu0 0
    %264 = vperm.xlu0 %263, %v230
    %v265 = vpop.permute.xlu0 %264
    %268 = vset.pattern.permute.xlu0 0
    %269 = vperm.xlu0 %268, %v231
    %v270 = vpop.permute.xlu0 %269
    %273 = vset.pattern.permute.xlu0 0
    %274 = vperm.xlu0 %273, %v232
    %v275 = vpop.permute.xlu0 %274
    %278 = vset.pattern.permute.xlu0 0
    %279 = vperm.xlu0 %278, %v233
    %v280 = vpop.permute.xlu0 %279
    %283 = vset.pattern.permute.xlu0 0
    %284 = vperm.xlu0 %283, %v234
    %v285 = vpop.permute.xlu0 %284
    %288 = vset.pattern.permute.xlu0 0
    %289 = vperm.xlu0 %288, %v235
    %v290 = vpop.permute.xlu0 %289
    %293 = vset.pattern.permute.xlu0 0
    %294 = vperm.xlu0 %293, %v236
    %v295 = vpop.permute.xlu0 %294
    %298 = vset.pattern.permute.xlu0 0
    %299 = vperm.xlu0 %298, %v237
    %v300 = vpop.permute.xlu0 %299
    %303 = vset.pattern.permute.xlu0 0
    %304 = vperm.xlu0 %303, %v238
    %v305 = vpop.permute.xlu0 %304
    %308 = vset.pattern.permute.xlu0 0
    %309 = vperm.xlu0 %308, %v239
    %v310 = vpop.permute.xlu0 %309
    %313 = vset.pattern.permute.xlu0 0
    %314 = vperm.xlu0 %313, %v240
    %v315 = vpop.permute.xlu0 %314
    %318 = vset.pattern.permute.xlu0 0
    %319 = vperm.xlu0 %318, %v241
    %v320 = vpop.permute.xlu0 %319
    %v322 = vmul.f32 %v148, %v245
    %v323 = vmul.f32 %v153, %v250
    %v324 = vmul.f32 %v158, %v255
    %v325 = vmul.f32 %v163, %v260
    %v326 = vmul.f32 %v168, %v265
    %v327 = vmul.f32 %v173, %v270
    %v328 = vmul.f32 %v178, %v275
    %v329 = vmul.f32 %v183, %v280
    %v330 = vmul.f32 %v188, %v285
    %v331 = vmul.f32 %v193, %v290
    %v332 = vmul.f32 %v198, %v295
    %v333 = vmul.f32 %v203, %v300
    %v334 = vmul.f32 %v208, %v305
    %v335 = vmul.f32 %v213, %v310
    %v336 = vmul.f32 %v218, %v315
    %v337 = vmul.f32 %v223, %v320
    %v338 = vpack.c.bf16 %v323, %v322
    %v339 = vpack.c.bf16 %v325, %v324
    %v340 = vpack.c.bf16 %v327, %v326
    %v341 = vpack.c.bf16 %v329, %v328
    %v342 = vpack.c.bf16 %v331, %v330
    %v343 = vpack.c.bf16 %v333, %v332
    %v344 = vpack.c.bf16 %v335, %v334
    %v345 = vpack.c.bf16 %v337, %v336
    %v354 = vunpack.c.l.b16 %v338
    %v355 = vunpack.c.h.b16 %v338
    %v356 = vunpack.c.l.b16 %v339
    %v357 = vunpack.c.h.b16 %v339
    %v358 = vunpack.c.l.b16 %v340
    %v359 = vunpack.c.h.b16 %v340
    %v360 = vunpack.c.l.b16 %v341
    %v361 = vunpack.c.h.b16 %v341
    %v362 = vunpack.c.l.b16 %v342
    %v363 = vunpack.c.h.b16 %v342
    %v364 = vunpack.c.l.b16 %v343
    %v365 = vunpack.c.h.b16 %v343
    %v366 = vunpack.c.l.b16 %v344
    %v367 = vunpack.c.h.b16 %v344
    %v368 = vunpack.c.l.b16 %v345
    %v369 = vunpack.c.h.b16 %v345
    %v370 = vpack.c.b16 %v354, %v354
    %v371 = vpack.c.b16 %v355, %v355
    %v372 = vpack.c.b16 %v356, %v356
    %v373 = vpack.c.b16 %v357, %v357
    %v374 = vpack.c.b16 %v358, %v358
    %v375 = vpack.c.b16 %v359, %v359
    %v376 = vpack.c.b16 %v360, %v360
    %v377 = vpack.c.b16 %v361, %v361
    %v378 = vpack.c.b16 %v362, %v362
    %v379 = vpack.c.b16 %v363, %v363
    %v380 = vpack.c.b16 %v364, %v364
    %v381 = vpack.c.b16 %v365, %v365
    %v382 = vpack.c.b16 %v366, %v366
    %v383 = vpack.c.b16 %v367, %v367
    %v384 = vpack.c.b16 %v368, %v368
    %v385 = vpack.c.b16 %v369, %v369
    %402 = vst [vmem:[#allocation2] sm:$0xf] %v370
    %403 = vst [vmem:[#allocation2 + $0x4] sm:$0xf] %v371
    %404 = vst [vmem:[#allocation2 + $0x8] sm:$0xf] %v372
    %405 = vst [vmem:[#allocation2 + $0xc] sm:$0xf] %v373
    %406 = vst [vmem:[#allocation2 + $0x10] sm:$0xf] %v374
    %407 = vst [vmem:[#allocation2 + $0x14] sm:$0xf] %v375
    %408 = vst [vmem:[#allocation2 + $0x18] sm:$0xf] %v376
    %409 = vst [vmem:[#allocation2 + $0x1c] sm:$0xf] %v377
    %410 = vst [vmem:[#allocation2 + $0x20] sm:$0xf] %v378
    %411 = vst [vmem:[#allocation2 + $0x24] sm:$0xf] %v379
    %412 = vst [vmem:[#allocation2 + $0x28] sm:$0xf] %v380
    %413 = vst [vmem:[#allocation2 + $0x2c] sm:$0xf] %v381
    %414 = vst [vmem:[#allocation2 + $0x30] sm:$0xf] %v382
    %415 = vst [vmem:[#allocation2 + $0x34] sm:$0xf] %v383
    %416 = vst [vmem:[#allocation2 + $0x38] sm:$0xf] %v384
    %417 = vst [vmem:[#allocation2 + $0x3c] sm:$0xf] %v385
    // Predicated region
    $region14: #{tpu_custom_call.1} parent=1 // pred_check
      _
    $region15: #{tpu_custom_call.1} parent=1 // pred_check_branch
      %419 = sbr.rel (0) target = $region17
    $region16: #{tpu_custom_call.1} parent=1 // pred_region
      %s421 = ssub.s32 1024, 1024
      %422 = vsyncadd [#allocation3], %s421
      %s423 = sshll.u32 [#allocation2], 4
      %s424 = int_to_ptr.vmem [resolvable:$true] %s423
      %429 = dma.vmem_to_hbm [thread:$0]  %s424, 1024, %s3, [#allocation3], 64, 64, 4
    $region17: #{tpu_custom_call.1} parent=1 // pred_fallthru
      _
    // Predicated region
    $region18: #{tpu_custom_call.1} parent=1 // pred_check
      _
    $region19: #{tpu_custom_call.1} parent=1 // pred_check_branch
      %431 = sbr.rel (0) target = $region21
    $region20: #{tpu_custom_call.1} parent=1 // pred_region
      %432 = dma.done [#allocation3], 1024
    $region21: #{tpu_custom_call.1} parent=1 // pred_fallthru
      _
    %433 = vsyncpa [#allocation3], 1

</llo_original>
